<compile_context>
chip_gen: v6e
topology: v6e:2x2x1
jax: 0.10.0
libtpu: 0.0.40
codegen_flags: <defaults>
</compile_context>

<pallas_src>
import functools

import jax
import jax.numpy as jnp
from jax import lax
from jax.experimental import pallas as pl
from jax.experimental.pallas import tpu as pltpu


def dwconv_kernel(x_ref, w_ref, b_ref, o_ref, *, H, C, SR, n_strips):
    # x_ref/o_ref: (TR, W*C) with TR = n_strips*SR and SR = imgs_per_strip*H;
    #              row = b*H + h, lane = w*C + c.
    # w_ref: (9, W*C) 3x3 taps tiled along lanes; column-edge lanes already
    #        zeroed for the dx=-1 (k=0,3,6) and dx=+1 (k=2,5,8) taps.
    # b_ref: (1, W*C) bias tiled along lanes.
    WC = x_ref.shape[1]

    # Load weights/bias once per block; hoist the 9 static row slices.
    w = w_ref[...]
    b = b_ref[...]
    w_rows = [w[k:k + 1, :] for k in range(9)]

    # Row index within each image (strips always start on an image boundary).
    row = lax.broadcasted_iota(jnp.int32, (SR, 1), 0) % H
    m_top = row >= 1          # dy = -1 taps valid
    m_bot = row < (H - 1)     # dy = +1 taps valid

    def conv_strip(r0):
        x = x_ref[pl.ds(r0, SR), :]                # (SR, WC), input dtype
        acc = x * w_rows[4]                         # centre tap (dy=0, dx=0)
        for dy, rmask in ((-1, m_top), (0, None), (1, m_bot)):
            x_h = x if dy == 0 else pltpu.roll(x, (-dy) % SR, 0)
            if rmask is not None:                   # 1 select per dy (hoisted)
                x_h = jnp.where(rmask, x_h, 0)
            for dx in (-1, 0, 1):
                if dy == 0 and dx == 0:
                    continue
                x_hw = x_h if dx == 0 else pltpu.roll(x_h, (-dx * C) % WC, 1)
                k = (dy + 1) * 3 + (dx + 1)
                acc = acc + x_hw * w_rows[k]        # col padding is in w_rows
        acc = acc + b
        o_ref[pl.ds(r0, SR), :] = acc.astype(o_ref.dtype)

    if n_strips == 1:
        conv_strip(0)
    else:
        def body(s, carry):
            conv_strip(pl.multiple_of(s * SR, SR))
            return carry
        lax.fori_loop(0, n_strips, body, 0)


def _vmem_budget():
    """(target block bytes, vmem_limit_bytes) from detected VMEM capacity."""
    try:
        cap = int(pltpu.get_tpu_info().vmem_capacity_bytes)
    except Exception:
        cap = 64 * 1024 * 1024                      # conservative fallback
    if cap <= 64 * 1024 * 1024:                     # v7x-class: 64 MiB, 2 TCs
        return 1 * 1024 * 1024, 32 * 1024 * 1024
    return 4 * 1024 * 1024, 64 * 1024 * 1024        # v5e / v6e: 128 MiB VMEM


def _choose_batch_tile(B, H, WC, itemsize, target_bytes):
    """#images per block: divides B, dtype-aware sublane-aligned rows,
    and >= 2 grid steps when B >= 2 (keeps both v7x TensorCores busy)."""
    sub = max(8, 32 // itemsize)        # 8 f32 / 16 bf16 / 32 int8-fp8
    per_image = H * WC * itemsize
    want = max(1, target_bytes // max(per_image, 1))
    cap = max(1, B // 2)
    cands = [d for d in range(1, cap + 1)
             if B % d == 0 and (d * H) % sub == 0]
    if not cands:
        return B                        # full axis: always a legal block
    le = [d for d in cands if d <= want]
    return max(le) if le else min(cands)


def _choose_imgs_per_strip(tb, H, WC, itemsize, target_bytes=256 * 1024):
    """#images per in-kernel strip: divides tb, prefer sublane-aligned rows."""
    sub = max(8, 32 // itemsize)
    per_image = H * WC * itemsize
    s = max(1, min(tb, target_bytes // max(per_image, 1)))
    while tb % s != 0:
        s -= 1
    if (s * H) % sub != 0:
        aligned = [d for d in range(s, tb + 1)
                   if tb % d == 0 and (d * H) % sub == 0]
        if aligned:
            s = aligned[0]
    return s


def dwconv_forward(x, H, W, weight_hwc, bias, *, block_batch=None):
    """x: (B, N, C) with N == H*W.
    weight_hwc: (3, 3, C)  (PyTorch depthwise weight (C,1,3,3) permuted as
                            weight[:, 0].permute(1, 2, 0)).
    bias: (C,)."""
    B, N, C = x.shape
    assert N == H * W
    WC = W * C
    # TODO(synk): if W*C is not a multiple of 128, pad channels at the caller
    # so the output lane dim stays fully dense (unmasked vst).

    # (B, H*W, C) -> (B*H, W*C): pure reshape (row = b*H + h, lane = w*C + c).
    x2 = x.reshape(B * H, WC)

    # Pre-tile weights/bias along the lane axis (lane j uses channel j % C)
    # and fold the column-edge zero padding into the weights: dx=-1 taps
    # (k = 0,3,6) contribute nothing at w == 0, dx=+1 taps (k = 2,5,8)
    # contribute nothing at w == W-1.
    w_tiled = jnp.tile(weight_hwc, (1, 1, W)).reshape(9, WC)
    lane = jnp.arange(WC)
    dx_k = (jnp.arange(9) % 3) - 1
    col_ok = jnp.where((dx_k == -1)[:, None], (lane >= C)[None, :],
                       jnp.where((dx_k == 1)[:, None],
                                 (lane < (W - 1) * C)[None, :], True))
    w_tiled = jnp.where(col_ok, w_tiled, 0).astype(x.dtype)
    b_tiled = jnp.tile(bias, (W,)).reshape(1, WC).astype(x.dtype)

    itemsize = jnp.dtype(x.dtype).itemsize
    blk_target, vmem_limit = _vmem_budget()
    tb = (_choose_batch_tile(B, H, WC, itemsize, blk_target)
          if block_batch is None else block_batch)
    assert B % tb == 0, "block_batch must divide B (no partial blocks)"
    ips = _choose_imgs_per_strip(tb, H, WC, itemsize)
    SR = ips * H
    n_strips = tb // ips
    TR = tb * H
    grid = (B // tb,)

    cost = pl.CostEstimate(
        flops=18 * B * H * W * C,
        transcendentals=0,
        bytes_accessed=2 * B * H * W * C * itemsize + 10 * WC * itemsize,
    )

    out = pl.pallas_call(
        functools.partial(dwconv_kernel, H=H, C=C, SR=SR, n_strips=n_strips),
        out_shape=jax.ShapeDtypeStruct((B * H, WC), x.dtype),
        grid=grid,
        in_specs=[
            pl.BlockSpec((TR, WC), lambda i: (i, 0)),
            pl.BlockSpec((9, WC), lambda i: (0, 0)),
            pl.BlockSpec((1, WC), lambda i: (0, 0)),
        ],
        out_specs=pl.BlockSpec((TR, WC), lambda i: (i, 0)),
        compiler_params=pltpu.CompilerParams(
            dimension_semantics=("parallel",),
            vmem_limit_bytes=vmem_limit,
        ),
        cost_estimate=cost,
    )(x2, w_tiled, b_tiled)

    return out.reshape(B, N, C)


if __name__ == "__main__":
    # Small shapes consistent with the module: dim (=C) = 32, B = 2, H = W = 8.
    B, H, W, C = 2, 8, 8, 32
    N = H * W

    key = jax.random.PRNGKey(0)
    kx, kw, kb = jax.random.split(key, 3)
    x = jax.random.normal(kx, (B, N, C), dtype=jnp.float32)
    # PyTorch depthwise weight is (C, 1, 3, 3); stored here as (3, 3, C).
    weight_hwc = jax.random.normal(kw, (3, 3, C), dtype=jnp.float32) * 0.1
    bias = jax.random.normal(kb, (C,), dtype=jnp.float32) * 0.1

    out = dwconv_forward(x, H, W, weight_hwc, bias)
    out = jax.block_until_ready(out)

    # Pure-JAX reference (depthwise conv via feature_group_count) for sanity.
    x_img = x.reshape(B, H, W, C)
    w_hwio = weight_hwc.reshape(3, 3, 1, C)
    ref = lax.conv_general_dilated(
        x_img, w_hwio, window_strides=(1, 1), padding="SAME",
        dimension_numbers=("NHWC", "HWIO", "NHWC"), feature_group_count=C,
    ) + bias
    ref = ref.reshape(B, N, C)

    assert out.shape == (B, N, C)
    assert jnp.allclose(out, ref, atol=1e-5, rtol=1e-5)
    print("KERNEL_OK")
</pallas_src>

<mosaic_0001>
module attributes {stable_mosaic.version = 11 : i64} {
  func.func @dwconv_kernel(%arg0: i32, %arg1: memref<8x256xf32, #tpu.memory_space<vmem>>, %arg2: memref<9x256xf32, #tpu.memory_space<vmem>>, %arg3: memref<1x256xf32, #tpu.memory_space<vmem>>, %arg4: memref<8x256xf32, #tpu.memory_space<vmem>>) attributes {dimension_semantics = [#tpu.dimension_semantics<parallel>], iteration_bounds = array<i64: 2>, scalar_prefetch = 0 : i64, scratch_operands = 0 : i64, tpu.core_type = #tpu.core_type<tc>, window_params = [{transform_indices = @transform_0, window_bounds = array<i64: 8, 256>}, {pipeline_mode = #tpu.pipeline_mode<synchronous>, transform_indices = @transform_1, window_bounds = array<i64: 9, 256>}, {pipeline_mode = #tpu.pipeline_mode<synchronous>, transform_indices = @transform_2, window_bounds = array<i64: 1, 256>}, {transform_indices = @transform_3, window_bounds = array<i64: 8, 256>}]} {
    %c0 = arith.constant 0 : index
    %c0_0 = arith.constant 0 : index
    %0 = vector.load %arg2[%c0, %c0_0] : memref<9x256xf32, #tpu.memory_space<vmem>>, vector<9x256xf32>
    %c0_1 = arith.constant 0 : index
    %c0_2 = arith.constant 0 : index
    %1 = vector.load %arg3[%c0_1, %c0_2] : memref<1x256xf32, #tpu.memory_space<vmem>>, vector<1x256xf32>
    %2 = vector.extract_strided_slice %0 {offsets = [0, 0], sizes = [1, 256], strides = [1, 1]} : vector<9x256xf32> to vector<1x256xf32>
    %3 = vector.extract_strided_slice %0 {offsets = [1, 0], sizes = [1, 256], strides = [1, 1]} : vector<9x256xf32> to vector<1x256xf32>
    %4 = vector.extract_strided_slice %0 {offsets = [2, 0], sizes = [1, 256], strides = [1, 1]} : vector<9x256xf32> to vector<1x256xf32>
    %5 = vector.extract_strided_slice %0 {offsets = [3, 0], sizes = [1, 256], strides = [1, 1]} : vector<9x256xf32> to vector<1x256xf32>
    %6 = vector.extract_strided_slice %0 {offsets = [4, 0], sizes = [1, 256], strides = [1, 1]} : vector<9x256xf32> to vector<1x256xf32>
    %7 = vector.extract_strided_slice %0 {offsets = [5, 0], sizes = [1, 256], strides = [1, 1]} : vector<9x256xf32> to vector<1x256xf32>
    %8 = vector.extract_strided_slice %0 {offsets = [6, 0], sizes = [1, 256], strides = [1, 1]} : vector<9x256xf32> to vector<1x256xf32>
    %9 = vector.extract_strided_slice %0 {offsets = [7, 0], sizes = [1, 256], strides = [1, 1]} : vector<9x256xf32> to vector<1x256xf32>
    %10 = vector.extract_strided_slice %0 {offsets = [8, 0], sizes = [1, 256], strides = [1, 1]} : vector<9x256xf32> to vector<1x256xf32>
    %11 = tpu.iota {dimensions = array<i32: 0>} : vector<8x1xi32>
    %c8_i32 = arith.constant 8 : i32
    %c0_i32 = arith.constant 0 : i32
    %12 = arith.cmpi eq, %c8_i32, %c0_i32 : i32
    %c1_i32 = arith.constant 1 : i32
    %13 = arith.select %12, %c1_i32, %c8_i32 : i32
    %14 = vector.broadcast %13 : i32 to vector<8x1xi32>
    %15 = arith.remsi %11, %14 : vector<8x1xi32>
    %c0_i32_3 = arith.constant 0 : i32
    %16 = vector.broadcast %c0_i32_3 : i32 to vector<8x1xi32>
    %17 = arith.cmpi ne, %15, %16 : vector<8x1xi32>
    %c0_i32_4 = arith.constant 0 : i32
    %18 = vector.broadcast %c0_i32_4 : i32 to vector<8x1xi32>
    %19 = arith.cmpi slt, %15, %18 : vector<8x1xi32>
    %c0_i32_5 = arith.constant 0 : i32
    %20 = arith.cmpi slt, %13, %c0_i32_5 : i32
    %21 = vector.broadcast %20 : i1 to vector<8x1xi1>
    %22 = vector.broadcast %21 : vector<8x1xi1> to vector<8x1xi1>
    %23 = arith.xori %19, %22 : vector<8x1xi1>
    %24 = arith.andi %23, %17 : vector<8x1xi1>
    %25 = vector.broadcast %13 : i32 to vector<8x1xi32>
    %26 = arith.addi %15, %25 : vector<8x1xi32>
    %27 = arith.select %24, %26, %15 : vector<8x1xi1>, vector<8x1xi32>
    %c1_i32_6 = arith.constant 1 : i32
    %28 = vector.broadcast %c1_i32_6 : i32 to vector<8x1xi32>
    %29 = arith.cmpi sge, %27, %28 : vector<8x1xi32>
    %c7_i32 = arith.constant 7 : i32
    %30 = vector.broadcast %c7_i32 : i32 to vector<8x1xi32>
    %31 = arith.cmpi slt, %27, %30 : vector<8x1xi32>
    %c0_7 = arith.constant 0 : index
    %c0_8 = arith.constant 0 : index
    %32 = vector.load %arg1[%c0_7, %c0_8] : memref<8x256xf32, #tpu.memory_space<vmem>>, vector<8x256xf32>
    %33 = vector.broadcast %6 : vector<1x256xf32> to vector<8x256xf32>
    %34 = arith.mulf %32, %33 : vector<8x256xf32>
    %c1_i32_9 = arith.constant 1 : i32
    %35 = tpu.dynamic_rotate %32 by %c1_i32_9 dim 0 : vector<8x256xf32>, i32 -> vector<8x256xf32>
    %c0_i32_10 = arith.constant 0 : i32
    %36 = arith.sitofp %c0_i32_10 : i32 to f32
    %37 = vector.shape_cast %29 : vector<8x1xi1> to vector<8x1xi1>
    %38 = vector.broadcast %37 : vector<8x1xi1> to vector<8x256xi1>
    %39 = vector.broadcast %36 : f32 to vector<8x256xf32>
    %40 = arith.select %38, %35, %39 : vector<8x256xi1>, vector<8x256xf32>
    %c32_i32 = arith.constant 32 : i32
    %41 = tpu.dynamic_rotate %40 by %c32_i32 dim 1 : vector<8x256xf32>, i32 -> vector<8x256xf32>
    %42 = vector.broadcast %2 : vector<1x256xf32> to vector<8x256xf32>
    %43 = arith.mulf %41, %42 : vector<8x256xf32>
    %44 = arith.addf %34, %43 : vector<8x256xf32>
    %45 = vector.broadcast %3 : vector<1x256xf32> to vector<8x256xf32>
    %46 = arith.mulf %40, %45 : vector<8x256xf32>
    %47 = arith.addf %44, %46 : vector<8x256xf32>
    %c224_i32 = arith.constant 224 : i32
    %48 = tpu.dynamic_rotate %40 by %c224_i32 dim 1 : vector<8x256xf32>, i32 -> vector<8x256xf32>
    %49 = vector.broadcast %4 : vector<1x256xf32> to vector<8x256xf32>
    %50 = arith.mulf %48, %49 : vector<8x256xf32>
    %51 = arith.addf %47, %50 : vector<8x256xf32>
    %c32_i32_11 = arith.constant 32 : i32
    %52 = tpu.dynamic_rotate %32 by %c32_i32_11 dim 1 : vector<8x256xf32>, i32 -> vector<8x256xf32>
    %53 = vector.broadcast %5 : vector<1x256xf32> to vector<8x256xf32>
    %54 = arith.mulf %52, %53 : vector<8x256xf32>
    %55 = arith.addf %51, %54 : vector<8x256xf32>
    %c224_i32_12 = arith.constant 224 : i32
    %56 = tpu.dynamic_rotate %32 by %c224_i32_12 dim 1 : vector<8x256xf32>, i32 -> vector<8x256xf32>
    %57 = vector.broadcast %7 : vector<1x256xf32> to vector<8x256xf32>
    %58 = arith.mulf %56, %57 : vector<8x256xf32>
    %59 = arith.addf %55, %58 : vector<8x256xf32>
    %c7_i32_13 = arith.constant 7 : i32
    %60 = tpu.dynamic_rotate %32 by %c7_i32_13 dim 0 : vector<8x256xf32>, i32 -> vector<8x256xf32>
    %c0_i32_14 = arith.constant 0 : i32
    %61 = arith.sitofp %c0_i32_14 : i32 to f32
    %62 = vector.shape_cast %31 : vector<8x1xi1> to vector<8x1xi1>
    %63 = vector.broadcast %62 : vector<8x1xi1> to vector<8x256xi1>
    %64 = vector.broadcast %61 : f32 to vector<8x256xf32>
    %65 = arith.select %63, %60, %64 : vector<8x256xi1>, vector<8x256xf32>
    %c32_i32_15 = arith.constant 32 : i32
    %66 = tpu.dynamic_rotate %65 by %c32_i32_15 dim 1 : vector<8x256xf32>, i32 -> vector<8x256xf32>
    %67 = vector.broadcast %8 : vector<1x256xf32> to vector<8x256xf32>
    %68 = arith.mulf %66, %67 : vector<8x256xf32>
    %69 = arith.addf %59, %68 : vector<8x256xf32>
    %70 = vector.broadcast %9 : vector<1x256xf32> to vector<8x256xf32>
    %71 = arith.mulf %65, %70 : vector<8x256xf32>
    %72 = arith.addf %69, %71 : vector<8x256xf32>
    %c224_i32_16 = arith.constant 224 : i32
    %73 = tpu.dynamic_rotate %65 by %c224_i32_16 dim 1 : vector<8x256xf32>, i32 -> vector<8x256xf32>
    %74 = vector.broadcast %10 : vector<1x256xf32> to vector<8x256xf32>
    %75 = arith.mulf %73, %74 : vector<8x256xf32>
    %76 = arith.addf %72, %75 : vector<8x256xf32>
    %77 = vector.broadcast %1 : vector<1x256xf32> to vector<8x256xf32>
    %78 = arith.addf %76, %77 : vector<8x256xf32>
    %c0_17 = arith.constant 0 : index
    %c0_18 = arith.constant 0 : index
    %79 = vector.load %arg4[%c0_17, %c0_18] : memref<8x256xf32, #tpu.memory_space<vmem>>, vector<8x256xf32>
    tpu.vector_store %arg4[%c0_17, %c0_18], %78 {strides = array<i32>} : memref<8x256xf32, #tpu.memory_space<vmem>>, vector<8x256xf32>,
    return
  }
  func.func @transform_0(%arg0: i32) -> (i32, i32) {
    %c0_i32 = arith.constant 0 : i32
    %c0_i32_0 = arith.constant 0 : i32
    return %arg0, %c0_i32 : i32, i32
  }
  func.func @transform_1(%arg0: i32) -> (i32, i32) {
    %c0_i32 = arith.constant 0 : i32
    %c0_i32_0 = arith.constant 0 : i32
    %c0_i32_1 = arith.constant 0 : i32
    return %c0_i32, %c0_i32_0 : i32, i32
  }
  func.func @transform_2(%arg0: i32) -> (i32, i32) {
    %c0_i32 = arith.constant 0 : i32
    %c0_i32_0 = arith.constant 0 : i32
    %c0_i32_1 = arith.constant 0 : i32
    return %c0_i32, %c0_i32_0 : i32, i32
  }
  func.func @transform_3(%arg0: i32) -> (i32, i32) {
    %c0_i32 = arith.constant 0 : i32
    %c0_i32_0 = arith.constant 0 : i32
    return %arg0, %c0_i32 : i32, i32
  }
}

</mosaic_0001>

<llo_original>
// kernel: tpu_custom_call.1
$region0: #{tpu_custom_call.1}
  #allocation0 [shape = 'u32[]', space=smem, size = 0x4, offset = 0x4, fixed_abs, tag = 'smem constant byte address 0x4 - core index']
  #allocation1 [shape = 'u32[144,128]{1,0:T(1,128)}', space=vmem, size = 0x12000, scoped, tag = 'internal scratch']
  %s0 = inlined_call_operand.hbm [shape: f32[16,256], index: 0, kind: input, shape index: {}]
  %s1 = inlined_call_operand.hbm [shape: f32[9,256], index: 1, kind: input, shape index: {}]
  %s2 = inlined_call_operand.vmem [shape: f32[1,256], index: 2, kind: input, shape index: {}]
  %s3 = inlined_call_operand.hbm [shape: f32[16,256], index: 3, kind: output, shape index: {}]
  %s4 = sld [smem:[#allocation0]]
  $region53: #{tpu_custom_call.1} parent=0
    _
  %s6 = ssub.s32 1, %s4
  %s7 = scalar_select 0, %s6, %s4
  $region1: #{tpu_custom_call.1} parent=0
    #allocation2 [shape = 'u8[16384]{0}', space=vmem, size = 0x4000, scoped, tag = 'input window, operand 0']
    #allocation3 [shape = 's32[2]{0}', space=sflag, size = 0x8, scoped, tag = 'scoped memory for tpu_custom_call.1']
    #allocation4 [shape = 's32[2]{0}', space=sflag, size = 0x8, scoped, tag = 'scoped memory for tpu_custom_call.1']
    #allocation5 [shape = 'u8[16384]{0}', space=vmem, size = 0x4000, scoped, tag = 'input window, operand 1, single buffered']
    #allocation6 [shape = 's32[1]{0}', space=sflag, size = 0x4, scoped, tag = 'scoped memory for tpu_custom_call.1']
    #allocation7 [shape = 'u8[16384]{0}', space=vmem, size = 0x4000, scoped, tag = 'output window, operand 0']
    %8 = vsyncpa [#allocation3], 0
    %s9 = scalar_lea.sflag [#allocation3], 1
    %10 = vsyncpa %s9, 0
    %11 = vsyncpa [#allocation6], 0
    %12 = vsyncpa [#allocation4], 0
    %s13 = scalar_lea.sflag [#allocation4], 1
    %14 = vsyncpa %s13, 0
    loop: start=0, step=1, limit=4
    $region2: #{tpu_custom_call.1} parent=1 // loop_pre_header
      _
    $region3: #{tpu_custom_call.1} parent=1 // loop_header
      %s16 = sphi 0, %s20
      %p17 = scmp.ge.s32.totalorder %s16, 4
      %s26 = sphi 0, %s28
      %s29 = sphi 0, %s26
      %s30 = sphi 0, %s29
      %s46 = sphi 0, %s30
      %s50 = sphi 0, %s50
      %s52 = sphi 0, %s50
      %s53 = sphi 0, %s52
      %s67 = sphi 0, %s53
      %s71 = sphi 0, %s71
      %s73 = sphi 0, %s71
      %s74 = sphi 0, %s73
      %s88 = sphi 0, %s74
      %s94 = sphi 0, %s96
      %s97 = sphi 0, %s94
      %s98 = sphi 0, %s97
      %s114 = sphi 0, %s98
    $region4: #{tpu_custom_call.1} parent=1 // loop_header_branch
      %19 = sbr.rel (%p17) target = $region8
    $region5: #{tpu_custom_call.1} parent=1 // loop_body
      %s21 = ssub.s32 %s16, 1
      %s22 = ssub.s32 %s16, 2
      %s23 = sadd.s32 %s16, 1
      %s24 = ssub.s32 %s16, %s23
      %p25 = scmp.eq.s32.totalorder %s24, 0
      %s27 = sadd.s32 %s26, 1
      %s28 = scalar_select %p25, %s26, %s27
      %p31 = pneg %p25
      %p32 = scmp.eq.s32.totalorder %s16, 1
      %p33 = por %p31, %p32
      %p34 = scmp.ne.s32.totalorder %s26, %s29
      %p35 = scmp.eq.s32.totalorder %s16, 0
      %p36 = por %p34, %p35
      %p37 = scmp.ne.s32.totalorder %s26, %s29
      %p38 = scmp.eq.s32.totalorder %s21, 1
      %p39 = por %p37, %p38
      %p40 = scmp.ne.s32.totalorder %s29, %s30
      %p41 = scmp.eq.s32.totalorder %s21, 0
      %p42 = por %p40, %p41
      %p43 = scmp.ne.s32.totalorder %s29, %s30
      %p44 = scmp.eq.s32.totalorder %s22, 1
      %p45 = por %p43, %p44
      %p47 = scmp.ne.s32.totalorder %s30, %s46
      %p48 = scmp.eq.s32.totalorder %s22, 0
      %p49 = por %p47, %p48
      %s51 = sadd.s32 %s50, 1
      %p54 = scmp.eq.s32.totalorder %s16, 1
      %p55 = scmp.ne.s32.totalorder %s50, %s52
      %p56 = scmp.eq.s32.totalorder %s16, 0
      %p57 = por %p55, %p56
      %p58 = scmp.ne.s32.totalorder %s50, %s52
      %p59 = scmp.eq.s32.totalorder %s21, 1
      %p60 = por %p58, %p59
      %p61 = scmp.ne.s32.totalorder %s52, %s53
      %p62 = scmp.eq.s32.totalorder %s21, 0
      %p63 = por %p61, %p62
      %p64 = scmp.ne.s32.totalorder %s52, %s53
      %p65 = scmp.eq.s32.totalorder %s22, 1
      %p66 = por %p64, %p65
      %p68 = scmp.ne.s32.totalorder %s53, %s67
      %p69 = scmp.eq.s32.totalorder %s22, 0
      %p70 = por %p68, %p69
      %s72 = sadd.s32 %s71, 1
      %p75 = scmp.eq.s32.totalorder %s16, 1
      %p76 = scmp.ne.s32.totalorder %s71, %s73
      %p77 = scmp.eq.s32.totalorder %s16, 0
      %p78 = por %p76, %p77
      %p79 = scmp.ne.s32.totalorder %s71, %s73
      %p80 = scmp.eq.s32.totalorder %s21, 1
      %p81 = por %p79, %p80
      %p82 = scmp.ne.s32.totalorder %s73, %s74
      %p83 = scmp.eq.s32.totalorder %s21, 0
      %p84 = por %p82, %p83
      %p85 = scmp.ne.s32.totalorder %s73, %s74
      %p86 = scmp.eq.s32.totalorder %s22, 1
      %p87 = por %p85, %p86
      %p89 = scmp.ne.s32.totalorder %s74, %s88
      %p90 = scmp.eq.s32.totalorder %s22, 0
      %p91 = por %p89, %p90
      %s92 = ssub.s32 %s16, %s23
      %p93 = scmp.eq.s32.totalorder %s92, 0
      %s95 = sadd.s32 %s94, 1
      %s96 = scalar_select %p93, %s94, %s95
      %p99 = pneg %p93
      %p100 = scmp.eq.s32.totalorder %s16, 1
      %p101 = por %p99, %p100
      %p102 = scmp.ne.s32.totalorder %s94, %s97
      %p103 = scmp.eq.s32.totalorder %s16, 0
      %p104 = por %p102, %p103
      %p105 = scmp.ne.s32.totalorder %s94, %s97
      %p106 = scmp.eq.s32.totalorder %s21, 1
      %p107 = por %p105, %p106
      %p108 = scmp.ne.s32.totalorder %s97, %s98
      %p109 = scmp.eq.s32.totalorder %s21, 0
      %p110 = por %p108, %p109
      %p111 = scmp.ne.s32.totalorder %s97, %s98
      %p112 = scmp.eq.s32.totalorder %s22, 1
      %p113 = por %p111, %p112
      %p115 = scmp.ne.s32.totalorder %s98, %s114
      %p116 = scmp.eq.s32.totalorder %s22, 0
      %p117 = por %p115, %p116
      %p118 = scmp.le.s32.totalorder 1, %s16
      %p119 = scmp.lt.s32.totalorder %s16, 3
      %p120 = pnand %p118, %p119
      %p121 = pneg %p120
      // Predicated region
      $region9: #{tpu_custom_call.1} parent=5 // pred_check
        _
      $region10: #{tpu_custom_call.1} parent=5 // pred_check_branch
        %123 = sbr.rel (%p120) target = $region12
      $region11: #{tpu_custom_call.1} parent=5 // pred_region
        %s124 = ssub.s32 %s16, 1
        // Predicated region
        $region13: #{tpu_custom_call.1} parent=11 // pred_check
          %p125 = pneg %p63
        $region14: #{tpu_custom_call.1} parent=11 // pred_check_branch
          %127 = sbr.rel (%p125) target = $region16
        $region15: #{tpu_custom_call.1} parent=11 // pred_region
          %s129 = ssub.s32 512, 512
          %130 = vsyncadd [#allocation6], %s129
          %s131 = sshll.u32 [#allocation5], 4
          %s132 = int_to_ptr.vmem [resolvable:$true] %s131
          %137 = dma.hbm_to_vmem [thread:$0]  %s1, 512, %s132, [#allocation6], 256, 256, 16
        $region16: #{tpu_custom_call.1} parent=11 // pred_fallthru
          _
        // Predicated region
        $region17: #{tpu_custom_call.1} parent=11 // pred_check
          %p138 = pneg %p84
        $region18: #{tpu_custom_call.1} parent=11 // pred_check_branch
          %140 = sbr.rel (%p138) target = $region20
        $region19: #{tpu_custom_call.1} parent=11 // pred_region
          _
        $region20: #{tpu_custom_call.1} parent=11 // pred_fallthru
          _
      $region12: #{tpu_custom_call.1} parent=5 // pred_fallthru
        _
      %p141 = scmp.lt.s32.totalorder %s16, 2
      // Predicated region
      $region21: #{tpu_custom_call.1} parent=5 // pred_check
        %p142 = pneg %p141
      $region22: #{tpu_custom_call.1} parent=5 // pred_check_branch
        %144 = sbr.rel (%p142) target = $region24
      $region23: #{tpu_custom_call.1} parent=5 // pred_region
        // Predicated region
        $region25: #{tpu_custom_call.1} parent=23 // pred_check
          %p145 = pneg %p36
        $region26: #{tpu_custom_call.1} parent=23 // pred_check_branch
          %147 = sbr.rel (%p145) target = $region28
        $region27: #{tpu_custom_call.1} parent=23 // pred_region
          %s148 = sand.u32 %s26, 1
          %s149 = scalar_lea.sflag [#allocation3], %s148
          %s150 = sand.u32 %s26, 1
          %s151 = smul.addr %s150, 16
          %s152 = scalar_lea.vmem [#allocation2], %s151
          %s154 = ssub.s32 256, 256
          %155 = vsyncadd %s149, %s154
          %s156 = smul.addr %s16, 2
          %s157 = smul.addr %s156, 128
          %s158 = scalar_lea.hbm %s0, %s157
          %s160 = sshll.u32 %s152, 4
          %s161 = int_to_ptr.vmem [resolvable:$true] %s160
          %163 = dma.hbm_to_vmem [thread:$0]  %s158, 256, %s161, %s149
        $region28: #{tpu_custom_call.1} parent=23 // pred_fallthru
          _
      $region24: #{tpu_custom_call.1} parent=5 // pred_fallthru
        _
      %p164 = scmp.le.s32.totalorder 1, %s16
      %p165 = scmp.lt.s32.totalorder %s16, 3
      %p166 = pnand %p164, %p165
      %p167 = pneg %p166
      // Predicated region
      $region29: #{tpu_custom_call.1} parent=5 // pred_check
        _
      $region30: #{tpu_custom_call.1} parent=5 // pred_check_branch
        %169 = sbr.rel (%p166) target = $region32
      $region31: #{tpu_custom_call.1} parent=5 // pred_region
        %s170 = ssub.s32 %s16, 1
        %s171 = sand.u32 %s29, 1
        %s172 = scalar_lea.sflag [#allocation3], %s171
        %s173 = sand.u32 %s29, 1
        %s174 = smul.addr %s173, 16
        %s175 = scalar_lea.vmem [#allocation2], %s174
        // Predicated region
        $region33: #{tpu_custom_call.1} parent=31 // pred_check
          %p176 = pneg %p42
        $region34: #{tpu_custom_call.1} parent=31 // pred_check_branch
          %178 = sbr.rel (%p176) target = $region36
        $region35: #{tpu_custom_call.1} parent=31 // pred_region
          %179 = dma.done %s172, 256
        $region36: #{tpu_custom_call.1} parent=31 // pred_fallthru
          _
        // Predicated region
        $region37: #{tpu_custom_call.1} parent=31 // pred_check
          %p180 = pneg %p63
        $region38: #{tpu_custom_call.1} parent=31 // pred_check_branch
          %182 = sbr.rel (%p180) target = $region40
        $region39: #{tpu_custom_call.1} parent=31 // pred_region
          %183 = dma.done [#allocation6], 512
        $region40: #{tpu_custom_call.1} parent=31 // pred_fallthru
          _
        %s184 = sand.u32 %s29, 1
        %s185 = scalar_lea.sflag [#allocation3], %s184
        %s186 = sand.u32 %s29, 1
        %s187 = smul.addr %s186, 16
        %s188 = scalar_lea.vmem [#allocation2], %s187
        %p189 = pneg %p42
        %p190 = pneg %p39
        %p191 = pneg %p63
        %p192 = pneg %p60
        %p193 = pneg %p84
        %p194 = pneg %p81
        %p195 = pneg %p110
        %p196 = pneg %p107
        %s197 = sand.u32 %s97, 1
        %s198 = scalar_lea.sflag [#allocation4], %s197
        %s199 = sand.u32 %s97, 1
        %s200 = smul.addr %s199, 16
        %s201 = scalar_lea.vmem [#allocation7], %s200
        %v202 = vld [vmem:[#allocation5] sm:$0xff]
        %v203 = vld [vmem:[#allocation5 + $0x8] sm:$0xff]
        %v204 = vld [vmem:[#allocation5 + $0x10] sm:$0x1]
        %v205 = vld [vmem:[#allocation5 + $0x18] sm:$0x1]
        %v206 = vld [vmem:[%s2] sm:$0x3]
        %v207 = vlaneseq
        %v208 = vshrl.u32 %v207, 7
        %vm209 = vcmp.lt.s32.totalorder %v208, 0
        %v210 = vsub.s32 0, %v208
        %v211 = vsel %vm209, %v210, %v208
        %v212 = vshrl.u32 %v211, 3
        %v213 = vand.u32 %v211, 7
        %v214 = vsub.s32 0, %v213
        %v215 = vsel %vm209, %v214, %v213
        %vm216 = vcmp.ne.s32.totalorder %v215, 0
        %vm217 = vcmp.lt.s32.totalorder %v215, 0
        %vm218 = vmand %vm217, %vm216
        %v219 = vadd.s32 %v215, 8
        %v220 = vsel %vm218, %v219, %v215
        %vm221 = vcmp.ge.s32.totalorder %v220, 1
        %vm222 = vcmp.lt.s32.totalorder %v220, 7
        %v223 = vld [vmem:[%s175] sm:$0xff]
        %v224 = vld [vmem:[%s175 + $0x8] sm:$0xff]
        %v225 = vlaneseq
        %v226 = vshrl.u32 %v225, 7
        %v227 = vsub.s32 4, %v226
        %v228 = vrot.slane %v202, %v227
        %v229 = vlaneseq
        %v230 = vshrl.u32 %v229, 7
        %v231 = vsub.s32 4, %v230
        %v232 = vrot.slane %v203, %v231
        %v233 = vmul.f32 %v223, %v228
        %v234 = vmul.f32 %v224, %v232
        %v235 = vrot.slane %v223, 7
        %v236 = vrot.slane %v224, 7
        %v237 = vsel %vm221, 1, 0
        %vm238 = vcmp.eq.s32.totalorder %v237, 1
        %v239 = vsel %vm238, %v235, 0.0
        %v240 = vsel %vm238, %v236, 0.0
        %241 = vrot.lane.b32.xlu0 %v239, 32
        %v242 = vpop.permute.xlu0 %241
        %243 = vrot.lane.b32.xlu0 %v240, 32
        %v244 = vpop.permute.xlu0 %243
        %v245 = vlaneseq
        %v246 = vand.u32 %v245, 127
        %vm247 = vcmp.lt.s32.totalorder %v246, 32
        %v248 = vsel %vm247, %v242, %v244
        %v249 = vsel %vm247, %v244, %v242
        %v250 = vlaneseq
        %v251 = vshrl.u32 %v250, 7
        %v252 = vsub.s32 0, %v251
        %v253 = vrot.slane %v202, %v252
        %v254 = vlaneseq
        %v255 = vshrl.u32 %v254, 7
        %v256 = vsub.s32 0, %v255
        %v257 = vrot.slane %v203, %v256
        %v258 = vmul.f32 %v249, %v253
        %v259 = vmul.f32 %v248, %v257
        %v260 = vadd.f32 %v233, %v258
        %v261 = vadd.f32 %v234, %v259
        %v262 = vlaneseq
        %v263 = vshrl.u32 %v262, 7
        %v264 = vsub.s32 1, %v263
        %v265 = vrot.slane %v202, %v264
        %v266 = vlaneseq
        %v267 = vshrl.u32 %v266, 7
        %v268 = vsub.s32 1, %v267
        %v269 = vrot.slane %v203, %v268
        %v270 = vmul.f32 %v239, %v265
        %v271 = vmul.f32 %v240, %v269
        %v272 = vadd.f32 %v260, %v270
        %v273 = vadd.f32 %v261, %v271
        %274 = vrot.lane.b32.xlu0 %v239, 96
        %v275 = vpop.permute.xlu0 %274
        %276 = vrot.lane.b32.xlu0 %v240, 96
        %v277 = vpop.permute.xlu0 %276
        %vm278 = vcmp.lt.s32.totalorder %v246, 96
        %v279 = vsel %vm278, %v275, %v277
        %v280 = vsel %vm278, %v277, %v275
        %v281 = vlaneseq
        %v282 = vshrl.u32 %v281, 7
        %v283 = vsub.s32 2, %v282
        %v284 = vrot.slane %v202, %v283
        %v285 = vlaneseq
        %v286 = vshrl.u32 %v285, 7
        %v287 = vsub.s32 2, %v286
        %v288 = vrot.slane %v203, %v287
        %v289 = vmul.f32 %v279, %v284
        %v290 = vmul.f32 %v280, %v288
        %v291 = vadd.f32 %v272, %v289
        %v292 = vadd.f32 %v273, %v290
        %293 = vrot.lane.b32.xlu0 %v223, 32
        %v294 = vpop.permute.xlu0 %293
        %295 = vrot.lane.b32.xlu0 %v224, 32
        %v296 = vpop.permute.xlu0 %295
        %v297 = vsel %vm247, %v294, %v296
        %v298 = vsel %vm247, %v296, %v294
        %v299 = vlaneseq
        %v300 = vshrl.u32 %v299, 7
        %v301 = vsub.s32 3, %v300
        %v302 = vrot.slane %v202, %v301
        %v303 = vlaneseq
        %v304 = vshrl.u32 %v303, 7
        %v305 = vsub.s32 3, %v304
        %v306 = vrot.slane %v203, %v305
        %v307 = vmul.f32 %v298, %v302
        %v308 = vmul.f32 %v297, %v306
        %v309 = vadd.f32 %v291, %v307
        %v310 = vadd.f32 %v292, %v308
        %311 = vrot.lane.b32.xlu0 %v223, 96
        %v312 = vpop.permute.xlu0 %311
        %313 = vrot.lane.b32.xlu0 %v224, 96
        %v314 = vpop.permute.xlu0 %313
        %v315 = vsel %vm278, %v312, %v314
        %v316 = vsel %vm278, %v314, %v312
        %v317 = vlaneseq
        %v318 = vshrl.u32 %v317, 7
        %v319 = vsub.s32 5, %v318
        %v320 = vrot.slane %v202, %v319
        %v321 = vlaneseq
        %v322 = vshrl.u32 %v321, 7
        %v323 = vsub.s32 5, %v322
        %v324 = vrot.slane %v203, %v323
        %v325 = vmul.f32 %v315, %v320
        %v326 = vmul.f32 %v316, %v324
        %v327 = vadd.f32 %v309, %v325
        %v328 = vadd.f32 %v310, %v326
        %v329 = vrot.slane %v223, 1
        %v330 = vrot.slane %v224, 1
        %v331 = vsel %vm222, 1, 0
        %vm332 = vcmp.eq.s32.totalorder %v331, 1
        %v333 = vsel %vm332, %v329, 0.0
        %v334 = vsel %vm332, %v330, 0.0
        %335 = vrot.lane.b32.xlu0 %v333, 32
        %v336 = vpop.permute.xlu0 %335
        %337 = vrot.lane.b32.xlu0 %v334, 32
        %v338 = vpop.permute.xlu0 %337
        %v339 = vsel %vm247, %v336, %v338
        %v340 = vsel %vm247, %v338, %v336
        %v341 = vlaneseq
        %v342 = vshrl.u32 %v341, 7
        %v343 = vsub.s32 6, %v342
        %v344 = vrot.slane %v202, %v343
        %v345 = vlaneseq
        %v346 = vshrl.u32 %v345, 7
        %v347 = vsub.s32 6, %v346
        %v348 = vrot.slane %v203, %v347
        %v349 = vmul.f32 %v340, %v344
        %v350 = vmul.f32 %v339, %v348
        %v351 = vadd.f32 %v327, %v349
        %v352 = vadd.f32 %v328, %v350
        %v353 = vlaneseq
        %v354 = vshrl.u32 %v353, 7
        %v355 = vsub.s32 7, %v354
        %v356 = vrot.slane %v202, %v355
        %v357 = vlaneseq
        %v358 = vshrl.u32 %v357, 7
        %v359 = vsub.s32 7, %v358
        %v360 = vrot.slane %v203, %v359
        %v361 = vmul.f32 %v333, %v356
        %v362 = vmul.f32 %v334, %v360
        %v363 = vadd.f32 %v351, %v361
        %v364 = vadd.f32 %v352, %v362
        %365 = vrot.lane.b32.xlu0 %v333, 96
        %v366 = vpop.permute.xlu0 %365
        %367 = vrot.lane.b32.xlu0 %v334, 96
        %v368 = vpop.permute.xlu0 %367
        %v369 = vsel %vm278, %v366, %v368
        %v370 = vsel %vm278, %v368, %v366
        %v371 = vlaneseq
        %v372 = vshrl.u32 %v371, 7
        %v373 = vsub.s32 0, %v372
        %v374 = vrot.slane %v204, %v373
        %v375 = vlaneseq
        %v376 = vshrl.u32 %v375, 7
        %v377 = vsub.s32 0, %v376
        %v378 = vrot.slane %v205, %v377
        %v379 = vmul.f32 %v369, %v374
        %v380 = vmul.f32 %v370, %v378
        %v381 = vadd.f32 %v363, %v379
        %v382 = vadd.f32 %v364, %v380
        %v384 = vlaneseq
        %v385 = vshrl.u32 %v384, 7
        %v386 = vsub.s32 0, %v385
        %v387 = vrot.slane %v206, %v386
        %v388 = vlaneseq
        %v389 = vshrl.u32 %v388, 7
        %v390 = vsub.s32 1, %v389
        %v391 = vrot.slane %v206, %v390
        %v394 = vadd.f32 %v381, %v387
        %v395 = vadd.f32 %v382, %v391
        %396 = vst [vmem:[%s201] sm:$0xff] %v394
        %397 = vst [vmem:[%s201 + $0x8] sm:$0xff] %v395
        %s398 = sand.u32 %s97, 1
        %s399 = scalar_lea.sflag [#allocation4], %s398
        %s400 = sand.u32 %s97, 1
        %s401 = smul.addr %s400, 16
        %s402 = scalar_lea.vmem [#allocation7], %s401
        // Predicated region
        $region41: #{tpu_custom_call.1} parent=31 // pred_check
          %p403 = pneg %p107
        $region42: #{tpu_custom_call.1} parent=31 // pred_check_branch
          %405 = sbr.rel (%p403) target = $region44
        $region43: #{tpu_custom_call.1} parent=31 // pred_region
          %s407 = ssub.s32 256, 256
          %408 = vsyncadd %s399, %s407
          %s409 = smul.addr %s21, 2
          %s410 = smul.addr %s409, 128
          %s411 = scalar_lea.hbm %s3, %s410
          %s413 = sshll.u32 %s402, 4
          %s414 = int_to_ptr.vmem [resolvable:$true] %s413
          %416 = dma.vmem_to_hbm [thread:$0]  %s414, 256, %s411, %s399
        $region44: #{tpu_custom_call.1} parent=31 // pred_fallthru
          _
      $region32: #{tpu_custom_call.1} parent=5 // pred_fallthru
        _
      %p417 = scmp.le.s32.totalorder 2, %s16
      // Predicated region
      $region45: #{tpu_custom_call.1} parent=5 // pred_check
        %p418 = pneg %p417
      $region46: #{tpu_custom_call.1} parent=5 // pred_check_branch
        %420 = sbr.rel (%p418) target = $region48
      $region47: #{tpu_custom_call.1} parent=5 // pred_region
        %s421 = ssub.s32 %s16, 2
        // Predicated region
        $region49: #{tpu_custom_call.1} parent=47 // pred_check
          %p422 = pneg %p113
        $region50: #{tpu_custom_call.1} parent=47 // pred_check_branch
          %424 = sbr.rel (%p422) target = $region52
        $region51: #{tpu_custom_call.1} parent=47 // pred_region
          %s425 = sand.u32 %s98, 1
          %s426 = scalar_lea.sflag [#allocation4], %s425
          %s427 = sand.u32 %s98, 1
          %s428 = smul.addr %s427, 16
          %s429 = scalar_lea.vmem [#allocation7], %s428
          %430 = dma.done %s426, 256
        $region52: #{tpu_custom_call.1} parent=47 // pred_fallthru
          _
      $region48: #{tpu_custom_call.1} parent=5 // pred_fallthru
        _
    $region6: #{tpu_custom_call.1} parent=1 // loop_footer
      %s20 = sadd.s32 1, %s16
    $region7: #{tpu_custom_call.1} parent=1 // loop_footer_branch
      %15 = sbr.rel target = $region3
    $region8: #{tpu_custom_call.1} parent=1 // loop_exit
      _
    %431 = vsyncpa [#allocation3], 1
    %s432 = scalar_lea.sflag [#allocation3], 1
    %433 = vsyncpa %s432, 1
    %434 = vsyncpa [#allocation6], 1
    %435 = vsyncpa [#allocation4], 1
    %s436 = scalar_lea.sflag [#allocation4], 1
    %437 = vsyncpa %s436, 1

</llo_original>
